<compile_context>
chip_gen: v7x
topology: tpu7x:2x2x1
jax: 0.10.0
libtpu: 0.0.40
codegen_flags: <defaults>
</compile_context>

<pallas_src>
import jax
import jax.numpy as jnp
from jax.experimental import pallas as pl
from jax.experimental.pallas import tpu as pltpu

_LANE = 128
_SUBLANE = 8
_MAX_COLS = 4096                       # lane-dense output slab, bounded
_TARGET_BLOCK_BYTES = 2 * 1024 * 1024  # ~2 MiB/block; safe on v5e/v6e/v7x VMEM


def _factor_scalar_kernel(factor_ref, x_ref, o_ref):
    # factor_ref: (1,) float32 scalar in SMEM (scalar prefetch).
    # x_ref / o_ref: (tile_rows, cols) tiles in VMEM.
    f = factor_ref[0]
    o_ref[...] = (x_ref[...].astype(jnp.float32) * f).astype(o_ref.dtype)


def _choose_cols(n):
    """Largest multiple of 128 dividing n (capped at _MAX_COLS); None if n % 128 != 0."""
    if n % _LANE != 0:
        return None
    k_max = min(_MAX_COLS // _LANE, n // _LANE)
    for k in range(k_max, 0, -1):
        c = k * _LANE
        if n % c == 0:
            return c
    return _LANE


def _choose_tile_rows(rows, cols, itemsize):
    target = max(
        _SUBLANE,
        (_TARGET_BLOCK_BYTES // max(cols * itemsize, 1)) // _SUBLANE * _SUBLANE,
    )
    if rows <= target:
        return rows  # block == full array; (8,128) divisibility not required
    return target    # multiple of 8; partial last block handled by Pallas


def _run_2d(x2d, factor_f32, tile_rows, cols):
    rows = x2d.shape[0]
    grid = (pl.cdiv(rows, tile_rows),)
    return pl.pallas_call(
        _factor_scalar_kernel,
        out_shape=jax.ShapeDtypeStruct(x2d.shape, x2d.dtype),
        grid_spec=pltpu.PrefetchScalarGridSpec(
            num_scalar_prefetch=1,
            grid=grid,
            in_specs=[pl.BlockSpec((tile_rows, cols), lambda i, f: (i, 0))],
            out_specs=pl.BlockSpec((tile_rows, cols), lambda i, f: (i, 0)),
        ),
        compiler_params=pltpu.CompilerParams(
            dimension_semantics=("parallel",),
        ),
    )(factor_f32, x2d)


def factor_scalar(inputs, factor):
    """out = factor * inputs  (factor is a 0-d learnable scalar)."""
    orig_shape = inputs.shape
    orig_dtype = inputs.dtype

    n = 1
    for d in orig_shape:
        n *= int(d)
    if n == 0:
        return inputs

    factor_f32 = jnp.asarray(factor, dtype=jnp.float32).reshape((1,))
    itemsize = jnp.dtype(orig_dtype).itemsize

    cols = _choose_cols(n)
    if cols is not None:
        # Fast path: no padding, no output slice; reshape is a free view.
        rows = n // cols
        x2d = inputs.reshape(rows, cols)
        tile_rows = _choose_tile_rows(rows, cols, itemsize)
        out2d = _run_2d(x2d, factor_f32, tile_rows, cols)
        return out2d.reshape(orig_shape)

    # Fallback (element count not a multiple of 128): one minimal pad + slice.
    # TODO(synk): for tiny/irregular shapes a plain XLA `factor * x` may beat
    # any Pallas launch; kept in-kernel here for a single codepath.
    cols = min(1024, pl.cdiv(n, _LANE) * _LANE)
    rows = pl.cdiv(n, cols)
    pad = rows * cols - n
    flat = jnp.pad(inputs.reshape(-1), (0, pad))
    x2d = flat.reshape(rows, cols)
    tile_rows = _choose_tile_rows(rows, cols, itemsize)
    out2d = _run_2d(x2d, factor_f32, tile_rows, cols)
    return out2d.reshape(-1)[:n].reshape(orig_shape)


class FactorScalarPallas:
    """JAX/Pallas equivalent of the PyTorch FactorScalar module (forward only)."""

    def __init__(self, initial_value=1.0):
        # Matches nn.Parameter(torch.tensor(initial_value)); kept in float32.
        self.factor = jnp.asarray(initial_value, dtype=jnp.float32)

    def on_task_end(self):
        pass

    def on_epoch_end(self):
        pass

    def forward(self, inputs):
        return factor_scalar(inputs, self.factor)

    def __call__(self, inputs):
        return self.forward(inputs)

    def __mul__(self, other):
        return self.forward(other)

    def __rmul__(self, other):
        return self.forward(other)


if __name__ == "__main__":
    key = jax.random.PRNGKey(0)
    # NCHW input, small shapes.
    x = jax.random.normal(key, (2, 4, 16, 16), dtype=jnp.float32)

    module = FactorScalarPallas(initial_value=1.0)
    out = jax.block_until_ready(module(x))
    assert out.shape == x.shape and out.dtype == x.dtype
    assert jnp.allclose(out, module.factor * x, atol=1e-6, rtol=1e-6)

    # Non-trivial factor value.
    module2 = FactorScalarPallas(initial_value=2.5)
    out2 = jax.block_until_ready(module2(x))
    assert jnp.allclose(out2, 2.5 * x, atol=1e-6, rtol=1e-6)

    # bf16 input exercises the f32-SMEM-scalar + cast-to-output-dtype path.
    xb = x.astype(jnp.bfloat16)
    outb = jax.block_until_ready(module2(xb))
    assert outb.dtype == jnp.bfloat16
    ref_b = (2.5 * xb.astype(jnp.float32)).astype(jnp.bfloat16)
    assert jnp.allclose(outb.astype(jnp.float32), ref_b.astype(jnp.float32),
                        atol=1e-2, rtol=1e-2)

    print("KERNEL_OK")
</pallas_src>

<mosaic_0001>
module attributes {stable_mosaic.version = 11 : i64} {
  func.func @_factor_scalar_kernel(%arg0: i32, %arg1: memref<1xf32, #tpu.memory_space<smem>>, %arg2: memref<1x2048xf32, #tpu.memory_space<vmem>>, %arg3: memref<1x2048xf32, #tpu.memory_space<vmem>>) attributes {dimension_semantics = [#tpu.dimension_semantics<parallel>], iteration_bounds = array<i64: 1>, scalar_prefetch = 1 : i64, scratch_operands = 0 : i64, tpu.core_type = #tpu.core_type<tc>, window_params = [{transform_indices = @transform_0, window_bounds = array<i64: 1, 2048>}, {transform_indices = @transform_1, window_bounds = array<i64: 1, 2048>}]} {
    %c0 = arith.constant 0 : index
    %0 = memref.load %arg1[%c0] : memref<1xf32, #tpu.memory_space<smem>>
    %c0_0 = arith.constant 0 : index
    %c0_1 = arith.constant 0 : index
    %1 = vector.load %arg2[%c0_0, %c0_1] : memref<1x2048xf32, #tpu.memory_space<vmem>>, vector<1x2048xf32>
    %2 = vector.broadcast %0 : f32 to vector<1x2048xf32>
    %3 = arith.mulf %1, %2 : vector<1x2048xf32>
    %c0_2 = arith.constant 0 : index
    %c0_3 = arith.constant 0 : index
    %4 = vector.load %arg3[%c0_2, %c0_3] : memref<1x2048xf32, #tpu.memory_space<vmem>>, vector<1x2048xf32>
    tpu.vector_store %arg3[%c0_2, %c0_3], %3 {strides = array<i32>} : memref<1x2048xf32, #tpu.memory_space<vmem>>, vector<1x2048xf32>,
    return
  }
  func.func @transform_0(%arg0: i32, %arg1: memref<1xf32, #tpu.memory_space<smem>>) -> (i32, i32) {
    %c0_i32 = arith.constant 0 : i32
    %c0_i32_0 = arith.constant 0 : i32
    return %arg0, %c0_i32 : i32, i32
  }
  func.func @transform_1(%arg0: i32, %arg1: memref<1xf32, #tpu.memory_space<smem>>) -> (i32, i32) {
    %c0_i32 = arith.constant 0 : i32
    %c0_i32_0 = arith.constant 0 : i32
    return %arg0, %c0_i32 : i32, i32
  }
}

</mosaic_0001>

<llo_original>
// kernel: tpu_custom_call.1
$region0: #{tpu_custom_call.1}
  #allocation0 [shape = 'u32[]', space=smem, size = 0x4, offset = 0x4, fixed_abs, tag = 'smem constant byte address 0x4 - core index']
  #allocation1 [shape = 'u32[144,128]{1,0:T(1,128)}', space=vmem, size = 0x12000, scoped, tag = 'internal scratch']
  #allocation2 [shape = 's32[1]{0}', space=sflag, size = 0x4, scoped, tag = 'scoped memory for tpu_custom_call.1']
  #allocation3 [shape = 'f32[1]{0:T(128)S(6)}', space=smem, size = 0x200, scoped, tag = 'prefetched SMEM operand 0']
  %s0 = inlined_call_operand.<no memory space> [shape: f32[1], index: 0, kind: input, shape index: {}]
  %s1 = inlined_call_operand.hbm [shape: f32[1,2048], index: 1, kind: input, shape index: {}]
  %s2 = inlined_call_operand.hbm [shape: f32[1,2048], index: 2, kind: output, shape index: {}]
  %s3 = sld [smem:[#allocation0]]
  $region18: #{tpu_custom_call.1} parent=0
    _
  %s5 = ssub.s32 1, %s3
  %s6 = scalar_select 0, %s5, %s3
  %7 = sst [smem:[#allocation3]] %s0
  $region1: #{tpu_custom_call.1} parent=0
    #allocation4 [shape = 'u8[8192]{0}', space=vmem, size = 0x2000, scoped, tag = 'input window, operand 1, single buffered']
    #allocation5 [shape = 's32[1]{0}', space=sflag, size = 0x4, scoped, tag = 'scoped memory for tpu_custom_call.1']
    #allocation6 [shape = 's32[1]{0}', space=sflag, size = 0x4, scoped, tag = 'scoped memory for tpu_custom_call.1']
    #allocation7 [shape = 'u8[8192]{0}', space=vmem, size = 0x2000, scoped, tag = 'output window, operand 0, single buffered']
    %8 = vsyncpa [#allocation5], 0
    %9 = vsyncpa [#allocation6], 0
    // Predicated region
    $region2: #{tpu_custom_call.1} parent=1 // pred_check
      _
    $region3: #{tpu_custom_call.1} parent=1 // pred_check_branch
      %11 = sbr.rel (0) target = $region5
    $region4: #{tpu_custom_call.1} parent=1 // pred_region
      %s13 = ssub.s32 256, 256
      %14 = vsyncadd [#allocation5], %s13
      %s16 = sshll.u32 [#allocation4], 4
      %s17 = int_to_ptr.vmem [resolvable:$true] %s16
      %19 = dma.hbm_to_vmem [thread:$0]  %s1, 256, %s17, [#allocation5]
    $region5: #{tpu_custom_call.1} parent=1 // pred_fallthru
      _
    // Predicated region
    $region6: #{tpu_custom_call.1} parent=1 // pred_check
      _
    $region7: #{tpu_custom_call.1} parent=1 // pred_check_branch
      %21 = sbr.rel (0) target = $region9
    $region8: #{tpu_custom_call.1} parent=1 // pred_region
      %22 = dma.done [#allocation5], 256
    $region9: #{tpu_custom_call.1} parent=1 // pred_fallthru
      _
    %s23 = sld [smem:[#allocation3]]
    %v24 = vld [vmem:[#allocation4] sm:$0xff]
    %v25 = vld [vmem:[#allocation4 + $0x8] sm:$0xff]
    %v26 = vstv %s23
    %v27 = vmul.f32 %v24, %v26
    %v28 = vmul.f32 %v25, %v26
    %29 = vst [vmem:[#allocation7] sm:$0xff] %v27
    %30 = vst [vmem:[#allocation7 + $0x8] sm:$0xff] %v28
    // Predicated region
    $region10: #{tpu_custom_call.1} parent=1 // pred_check
      _
    $region11: #{tpu_custom_call.1} parent=1 // pred_check_branch
      %32 = sbr.rel (0) target = $region13
    $region12: #{tpu_custom_call.1} parent=1 // pred_region
      %s34 = ssub.s32 256, 256
      %35 = vsyncadd [#allocation6], %s34
      %s37 = sshll.u32 [#allocation7], 4
      %s38 = int_to_ptr.vmem [resolvable:$true] %s37
      %40 = dma.vmem_to_hbm [thread:$0]  %s38, 256, %s2, [#allocation6]
    $region13: #{tpu_custom_call.1} parent=1 // pred_fallthru
      _
    // Predicated region
    $region14: #{tpu_custom_call.1} parent=1 // pred_check
      _
    $region15: #{tpu_custom_call.1} parent=1 // pred_check_branch
      %42 = sbr.rel (0) target = $region17
    $region16: #{tpu_custom_call.1} parent=1 // pred_region
      %43 = dma.done [#allocation6], 256
    $region17: #{tpu_custom_call.1} parent=1 // pred_fallthru
      _
    %44 = vsyncpa [#allocation5], 1
    %45 = vsyncpa [#allocation6], 1

</llo_original>
